<compile_context>
chip_gen: v5e
topology: v5e:2x2
jax: 0.10.0
libtpu: 0.0.40
codegen_flags: <defaults>
</compile_context>

<pallas_src>
import numpy as np
import jax
import jax.numpy as jnp
from jax.experimental import pallas as pl
from jax.experimental.pallas import tpu as pltpu


def _col_dup_matrix(wt, dtype):
    """One-hot (Wt, 2*Wt) matrix M with M[j, 2j] = M[j, 2j+1] = 1."""
    m = np.zeros((wt, 2 * wt), dtype=np.float32)
    j = np.arange(wt)
    m[j, 2 * j] = 1.0
    m[j, 2 * j + 1] = 1.0
    return jnp.asarray(m, dtype=dtype)


def _pick_wt(w):
    """Column tile: cap the matmul contraction at <=256 when W has a lane-
    friendly divisor; otherwise fall back to the full width (always legal)."""
    if w <= 256:
        return w
    for cand in (256, 128):
        if w % cand == 0:
            return cand
    return w


def _pick_rt(bh, cap):
    """Largest multiple-of-8 divisor of B*H under the VMEM cap, additionally
    capped so the grid keeps >=2 row steps (v7x megacore) when possible."""
    cap = max(1, cap)
    if bh >= 16:
        cap = min(cap, bh // 2)   # >= 2 parallel row blocks for v7x's 2 TCs
    cap = min(cap, 1024)          # blocks beyond ~512 rows already saturate HBM
    best = 0
    for d in range(8, cap + 1, 8):
        if bh % d == 0:
            best = d
    return best if best else bh   # fallback: full extent (always a legal block)


def _vmem_budget():
    """(working-set budget, explicit vmem limit) in bytes, generation-aware."""
    try:
        cap = int(getattr(pltpu.get_tpu_info(), "vmem_capacity_bytes",
                          64 * 1024 * 1024))
    except Exception:
        cap = 64 * 1024 * 1024
    working = min(cap // 4, 32 * 1024 * 1024)   # v5e/v6e: 32 MiB, v7x: 16 MiB
    limit = min(cap // 2, 64 * 1024 * 1024)     # v5e/v6e: 64 MiB, v7x: 32 MiB
    return working, limit


@jax.jit
def upsample_block(x):
    """Forward pass of UpSampleBlock: 2x nearest-neighbour upsample (NCHW)."""
    n, c, h, w = x.shape
    bh = n * c * h
    wt = _pick_wt(w)
    itemsize = jnp.dtype(x.dtype).itemsize
    acc_dtype = jnp.bfloat16 if jnp.dtype(x.dtype) == jnp.bfloat16 else jnp.float32

    working, vmem_limit = _vmem_budget()
    m_bytes = 2 * wt * (2 * wt) * itemsize            # double-buffered constant M
    per_row = 2 * 5 * wt * itemsize + 24 * wt         # dbl-buf in+out blocks + temps
    rt = _pick_rt(bh, (working - m_bytes) // per_row)

    xf = x.reshape(bh, w)                             # contiguous reshape -> free
    m = _col_dup_matrix(wt, x.dtype)                  # trace-time numpy constant

    def kernel(x_ref, m_ref, o_ref):
        # Column duplication as one one-hot MXU matmul (exact: each output
        # column has exactly one 1.0 term).
        y = jnp.dot(
            x_ref[...], m_ref[...],
            preferred_element_type=acc_dtype,
            precision=jax.lax.Precision.HIGHEST,
        ).astype(o_ref.dtype)
        # Row duplication: broadcast along the size-2 output axis; one dense store.
        o_ref[...] = jnp.broadcast_to(y[:, None, :], o_ref.shape)

    grid = (bh // rt, w // wt)
    out = pl.pallas_call(
        kernel,
        out_shape=jax.ShapeDtypeStruct((bh, 2, 2 * w), x.dtype),
        grid=grid,
        in_specs=[
            pl.BlockSpec((rt, wt), lambda r, wi: (r, wi)),
            pl.BlockSpec((wt, 2 * wt), lambda r, wi: (0, 0)),
        ],
        out_specs=pl.BlockSpec((rt, 2, 2 * wt), lambda r, wi: (r, 0, wi)),
        compiler_params=pltpu.CompilerParams(
            dimension_semantics=("parallel", "parallel"),
            vmem_limit_bytes=vmem_limit,
        ),
    )(xf, m)

    return out.reshape(n, c, 2 * h, 2 * w)            # contiguous reshape -> free


def _reference(x):
    # pure-JAX reference: nearest-neighbour 2x upsample (matches nn.Upsample).
    return jnp.repeat(jnp.repeat(x, 2, axis=2), 2, axis=3)


if __name__ == "__main__":
    key = jax.random.PRNGKey(0)

    # Small NCHW feature map, consistent with the module's use.
    x = jax.random.normal(key, (2, 4, 16, 16), dtype=jnp.float32)
    y = jax.block_until_ready(upsample_block(x))
    assert y.shape == (2, 4, 32, 32), y.shape
    assert jnp.allclose(y, _reference(x), rtol=1e-6, atol=1e-6), "mismatch (base)"

    # Wider image to exercise the W-tiled (capped-contraction) path.
    x2 = jax.random.normal(jax.random.PRNGKey(0), (1, 2, 8, 512), dtype=jnp.float32)
    y2 = jax.block_until_ready(upsample_block(x2))
    assert y2.shape == (1, 2, 16, 1024), y2.shape
    assert jnp.allclose(y2, _reference(x2), rtol=1e-6, atol=1e-6), "mismatch (wide)"

    print("KERNEL_OK")
</pallas_src>

<mosaic_0001>
module attributes {stable_mosaic.version = 11 : i64} {
  func.func @kernel(%arg0: i32, %arg1: i32, %arg2: memref<64x16xf32, #tpu.memory_space<vmem>>, %arg3: memref<16x32xf32, #tpu.memory_space<vmem>>, %arg4: memref<64x2x32xf32, #tpu.memory_space<vmem>>) attributes {dimension_semantics = [#tpu.dimension_semantics<parallel>, #tpu.dimension_semantics<parallel>], iteration_bounds = array<i64: 2, 1>, scalar_prefetch = 0 : i64, scratch_operands = 0 : i64, tpu.core_type = #tpu.core_type<tc>, window_params = [{transform_indices = @transform_0, window_bounds = array<i64: 64, 16>}, {pipeline_mode = #tpu.pipeline_mode<synchronous>, transform_indices = @transform_1, window_bounds = array<i64: 16, 32>}, {transform_indices = @transform_2, window_bounds = array<i64: 64, 2, 32>}]} {
    %c0 = arith.constant 0 : index
    %c0_0 = arith.constant 0 : index
    %0 = vector.load %arg2[%c0, %c0_0] : memref<64x16xf32, #tpu.memory_space<vmem>>, vector<64x16xf32>
    %c0_1 = arith.constant 0 : index
    %c0_2 = arith.constant 0 : index
    %1 = vector.load %arg3[%c0_1, %c0_2] : memref<16x32xf32, #tpu.memory_space<vmem>>, vector<16x32xf32>
    %cst = arith.constant dense<0.000000e+00> : vector<64x32xf32>
    %2 = tpu.matmul %0, %1, %cst {dimension_numbers = #tpu.dot_dimension_numbers<[1], [0], [0], [1], [0, 0, 1, 1], [], []>, precision = #tpu.contract_precision<fp32>} : vector<64x16xf32>, vector<16x32xf32>, vector<64x32xf32> -> vector<64x32xf32>
    %3 = vector.shape_cast %2 : vector<64x32xf32> to vector<64x1x32xf32>
    %4 = vector.shape_cast %3 : vector<64x1x32xf32> to vector<64x1x32xf32>
    %5 = vector.broadcast %4 : vector<64x1x32xf32> to vector<64x2x32xf32>
    %c0_3 = arith.constant 0 : index
    %c0_4 = arith.constant 0 : index
    %c0_5 = arith.constant 0 : index
    %6 = vector.load %arg4[%c0_3, %c0_4, %c0_5] : memref<64x2x32xf32, #tpu.memory_space<vmem>>, vector<64x2x32xf32>
    tpu.vector_store %arg4[%c0_3, %c0_4, %c0_5], %5 {strides = array<i32>} : memref<64x2x32xf32, #tpu.memory_space<vmem>>, vector<64x2x32xf32>,
    return
  }
  func.func @transform_0(%arg0: i32, %arg1: i32) -> (i32, i32) {
    %c0_i32 = arith.constant 0 : i32
    return %arg0, %arg1 : i32, i32
  }
  func.func @transform_1(%arg0: i32, %arg1: i32) -> (i32, i32) {
    %c0_i32 = arith.constant 0 : i32
    %c0_i32_0 = arith.constant 0 : i32
    %c0_i32_1 = arith.constant 0 : i32
    return %c0_i32, %c0_i32_0 : i32, i32
  }
  func.func @transform_2(%arg0: i32, %arg1: i32) -> (i32, i32, i32) {
    %c0_i32 = arith.constant 0 : i32
    %c0_i32_0 = arith.constant 0 : i32
    return %arg0, %c0_i32, %arg1 : i32, i32, i32
  }
}

</mosaic_0001>

<llo_original>
// kernel: upsample_block.1
$region0: #{upsample_block.1}
  #allocation0 [shape = 'u32[]', space=smem, size = 0x4, offset = 0x4, fixed_abs, tag = 'smem constant byte address 0x4 - core index']
  #allocation1 [shape = 'u32[72,128]{1,0:T(1,128)}', space=vmem, size = 0x9000, scoped, tag = 'internal scratch']
  %s0 = inlined_call_operand.hbm [shape: f32[128,16], index: 0, kind: input, shape index: {}]
  %s1 = inlined_call_operand.hbm [shape: f32[16,32], index: 1, kind: input, shape index: {}]
  %s2 = inlined_call_operand.hbm [shape: f32[128,2,32], index: 2, kind: output, shape index: {}]
  %s3 = sld [smem:[#allocation0]]
  $region49: #{upsample_block.1} parent=0
    _
  %s5 = ssub.s32 1, %s3
  %s6 = scalar_select 0, %s5, %s3
  $region1: #{upsample_block.1} parent=0
    #allocation2 [shape = 'u8[65536]{0}', space=vmem, size = 0x10000, scoped, tag = 'input window, operand 0']
    #allocation3 [shape = 's32[2]{0}', space=sflag, size = 0x8, scoped, tag = 'scoped memory for upsample_block.1']
    #allocation4 [shape = 's32[2]{0}', space=sflag, size = 0x8, scoped, tag = 'scoped memory for upsample_block.1']
    #allocation5 [shape = 'u8[8192]{0}', space=vmem, size = 0x2000, scoped, tag = 'input window, operand 1, single buffered']
    #allocation6 [shape = 's32[1]{0}', space=sflag, size = 0x4, scoped, tag = 'scoped memory for upsample_block.1']
    #allocation7 [shape = 'u8[131072]{0}', space=vmem, size = 0x20000, scoped, tag = 'output window, operand 0']
    %7 = vsyncpa [#allocation3], 0
    %s8 = scalar_lea.sflag [#allocation3], 1
    %9 = vsyncpa %s8, 0
    %10 = vsyncpa [#allocation6], 0
    %11 = vsyncpa [#allocation4], 0
    %s12 = scalar_lea.sflag [#allocation4], 1
    %13 = vsyncpa %s12, 0
    loop: start=0, step=1, limit=4
    $region2: #{upsample_block.1} parent=1 // loop_pre_header
      _
    $region3: #{upsample_block.1} parent=1 // loop_header
      %s15 = sphi 0, %s19
      %p16 = scmp.ge.s32.totalorder %s15, 4
      %s22 = sphi 0, %s34
      %s23 = sphi 0, %s30
      %s24 = sphi 0, %s22
      %s25 = sphi 0, %s23
      %s26 = sphi 0, %s24
      %s27 = sphi 0, %s25
      %s39 = sphi 0, %s41
      %s42 = sphi 0, %s39
      %s43 = sphi 0, %s42
      %s59 = sphi 0, %s43
      %s63 = sphi 0, %s63
      %s65 = sphi 0, %s63
      %s66 = sphi 0, %s65
      %s80 = sphi 0, %s66
      %s88 = sphi 0, %s90
      %s91 = sphi 0, %s88
      %s92 = sphi 0, %s91
      %s108 = sphi 0, %s92
    $region4: #{upsample_block.1} parent=1 // loop_header_branch
      %18 = sbr.rel (%p16) target = $region8
    $region5: #{upsample_block.1} parent=1 // loop_body
      %s20 = ssub.s32 %s15, 1
      %s21 = ssub.s32 %s15, 2
      %s28 = sadd.s32 1, %s23
      %p29 = scmp.ge.s32.totalorder %s28, 1
      %s30 = scalar_select %p29, 0, %s28
      %s31 = sadd.s32 1, %s22
      %s32 = scalar_select %p29, %s31, %s22
      %p33 = scmp.ge.s32.totalorder %s32, 2
      %s34 = scalar_select %p33, 0, %s32
      %s35 = ssub.s32 %s22, %s34
      %s36 = ssub.s32 %s23, %s30
      %s37 = sor.u32 %s35, %s36
      %p38 = scmp.eq.s32.totalorder %s37, 0
      %s40 = sadd.s32 %s39, 1
      %s41 = scalar_select %p38, %s39, %s40
      %p44 = pneg %p38
      %p45 = scmp.eq.s32.totalorder %s15, 1
      %p46 = por %p44, %p45
      %p47 = scmp.ne.s32.totalorder %s39, %s42
      %p48 = scmp.eq.s32.totalorder %s15, 0
      %p49 = por %p47, %p48
      %p50 = scmp.ne.s32.totalorder %s39, %s42
      %p51 = scmp.eq.s32.totalorder %s20, 1
      %p52 = por %p50, %p51
      %p53 = scmp.ne.s32.totalorder %s42, %s43
      %p54 = scmp.eq.s32.totalorder %s20, 0
      %p55 = por %p53, %p54
      %p56 = scmp.ne.s32.totalorder %s42, %s43
      %p57 = scmp.eq.s32.totalorder %s21, 1
      %p58 = por %p56, %p57
      %p60 = scmp.ne.s32.totalorder %s43, %s59
      %p61 = scmp.eq.s32.totalorder %s21, 0
      %p62 = por %p60, %p61
      %s64 = sadd.s32 %s63, 1
      %p67 = scmp.eq.s32.totalorder %s15, 1
      %p68 = scmp.ne.s32.totalorder %s63, %s65
      %p69 = scmp.eq.s32.totalorder %s15, 0
      %p70 = por %p68, %p69
      %p71 = scmp.ne.s32.totalorder %s63, %s65
      %p72 = scmp.eq.s32.totalorder %s20, 1
      %p73 = por %p71, %p72
      %p74 = scmp.ne.s32.totalorder %s65, %s66
      %p75 = scmp.eq.s32.totalorder %s20, 0
      %p76 = por %p74, %p75
      %p77 = scmp.ne.s32.totalorder %s65, %s66
      %p78 = scmp.eq.s32.totalorder %s21, 1
      %p79 = por %p77, %p78
      %p81 = scmp.ne.s32.totalorder %s66, %s80
      %p82 = scmp.eq.s32.totalorder %s21, 0
      %p83 = por %p81, %p82
      %s84 = ssub.s32 %s22, %s34
      %s85 = ssub.s32 %s23, %s30
      %s86 = sor.u32 %s84, %s85
      %p87 = scmp.eq.s32.totalorder %s86, 0
      %s89 = sadd.s32 %s88, 1
      %s90 = scalar_select %p87, %s88, %s89
      %p93 = pneg %p87
      %p94 = scmp.eq.s32.totalorder %s15, 1
      %p95 = por %p93, %p94
      %p96 = scmp.ne.s32.totalorder %s88, %s91
      %p97 = scmp.eq.s32.totalorder %s15, 0
      %p98 = por %p96, %p97
      %p99 = scmp.ne.s32.totalorder %s88, %s91
      %p100 = scmp.eq.s32.totalorder %s20, 1
      %p101 = por %p99, %p100
      %p102 = scmp.ne.s32.totalorder %s91, %s92
      %p103 = scmp.eq.s32.totalorder %s20, 0
      %p104 = por %p102, %p103
      %p105 = scmp.ne.s32.totalorder %s91, %s92
      %p106 = scmp.eq.s32.totalorder %s21, 1
      %p107 = por %p105, %p106
      %p109 = scmp.ne.s32.totalorder %s92, %s108
      %p110 = scmp.eq.s32.totalorder %s21, 0
      %p111 = por %p109, %p110
      %p112 = scmp.le.s32.totalorder 1, %s15
      %p113 = scmp.lt.s32.totalorder %s15, 3
      %p114 = pnand %p112, %p113
      %p115 = pneg %p114
      // Predicated region
      $region9: #{upsample_block.1} parent=5 // pred_check
        _
      $region10: #{upsample_block.1} parent=5 // pred_check_branch
        %117 = sbr.rel (%p114) target = $region12
      $region11: #{upsample_block.1} parent=5 // pred_region
        %s118 = ssub.s32 %s15, 1
        // Predicated region
        $region13: #{upsample_block.1} parent=11 // pred_check
          %p119 = pneg %p76
        $region14: #{upsample_block.1} parent=11 // pred_check_branch
          %121 = sbr.rel (%p119) target = $region16
        $region15: #{upsample_block.1} parent=11 // pred_region
          %123 = vsyncadd [#allocation6], 0
          %s124 = sshll.u32 %s1, 4
          %s125 = int_to_ptr.hbm [resolvable:$true] %s124
          %s126 = sshll.u32 [#allocation5], 4
          %s127 = int_to_ptr.vmem [resolvable:$true] %s126
          %132 = dma.hbm_to_vmem [thread:$0]  %s125, 256, %s127, [#allocation6], 128, 128, 8
        $region16: #{upsample_block.1} parent=11 // pred_fallthru
          _
      $region12: #{upsample_block.1} parent=5 // pred_fallthru
        _
      %p133 = scmp.lt.s32.totalorder %s15, 2
      // Predicated region
      $region17: #{upsample_block.1} parent=5 // pred_check
        %p134 = pneg %p133
      $region18: #{upsample_block.1} parent=5 // pred_check_branch
        %136 = sbr.rel (%p134) target = $region20
      $region19: #{upsample_block.1} parent=5 // pred_region
        // Predicated region
        $region21: #{upsample_block.1} parent=19 // pred_check
          %p137 = pneg %p49
        $region22: #{upsample_block.1} parent=19 // pred_check_branch
          %139 = sbr.rel (%p137) target = $region24
        $region23: #{upsample_block.1} parent=19 // pred_region
          %s140 = sand.u32 %s39, 1
          %s141 = scalar_lea.sflag [#allocation3], %s140
          %s142 = sand.u32 %s39, 1
          %s143 = smul.addr %s142, 64
          %s144 = scalar_lea.vmem [#allocation2], %s143
          %s145 = smul.u32 8, %s22
          %147 = vsyncadd %s141, 0
          %s148 = sadd.s32 %s23, %s145
          %s149 = smul.addr %s148, 8
          %s150 = scalar_lea.hbm %s0, %s149
          %s151 = sshll.u32 %s150, 4
          %s152 = int_to_ptr.hbm [resolvable:$true] %s151
          %s153 = sshll.u32 %s144, 4
          %s154 = int_to_ptr.vmem [resolvable:$true] %s153
          %159 = dma.hbm_to_vmem [thread:$0]  %s152, 1024, %s154, %s141, 128, 128, 8
        $region24: #{upsample_block.1} parent=19 // pred_fallthru
          _
      $region20: #{upsample_block.1} parent=5 // pred_fallthru
        _
      %p160 = scmp.le.s32.totalorder 1, %s15
      %p161 = scmp.lt.s32.totalorder %s15, 3
      %p162 = pnand %p160, %p161
      %p163 = pneg %p162
      // Predicated region
      $region25: #{upsample_block.1} parent=5 // pred_check
        _
      $region26: #{upsample_block.1} parent=5 // pred_check_branch
        %165 = sbr.rel (%p162) target = $region28
      $region27: #{upsample_block.1} parent=5 // pred_region
        %s166 = ssub.s32 %s15, 1
        %s167 = sand.u32 %s42, 1
        %s168 = scalar_lea.sflag [#allocation3], %s167
        %s169 = sand.u32 %s42, 1
        %s170 = smul.addr %s169, 64
        %s171 = scalar_lea.vmem [#allocation2], %s170
        // Predicated region
        $region29: #{upsample_block.1} parent=27 // pred_check
          %p172 = pneg %p55
        $region30: #{upsample_block.1} parent=27 // pred_check_branch
          %174 = sbr.rel (%p172) target = $region32
        $region31: #{upsample_block.1} parent=27 // pred_region
          %176 = dma.done %s168, 1024
        $region32: #{upsample_block.1} parent=27 // pred_fallthru
          _
        // Predicated region
        $region33: #{upsample_block.1} parent=27 // pred_check
          %p177 = pneg %p76
        $region34: #{upsample_block.1} parent=27 // pred_check_branch
          %179 = sbr.rel (%p177) target = $region36
        $region35: #{upsample_block.1} parent=27 // pred_region
          %181 = dma.done [#allocation6], 256
        $region36: #{upsample_block.1} parent=27 // pred_fallthru
          _
        %s182 = sand.u32 %s42, 1
        %s183 = scalar_lea.sflag [#allocation3], %s182
        %s184 = sand.u32 %s42, 1
        %s185 = smul.addr %s184, 64
        %s186 = scalar_lea.vmem [#allocation2], %s185
        %p187 = pneg %p55
        %p188 = pneg %p52
        %p189 = pneg %p76
        %p190 = pneg %p73
        %p191 = pneg %p104
        %p192 = pneg %p101
        %s193 = sand.u32 %s91, 1
        %s194 = scalar_lea.sflag [#allocation4], %s193
        %s195 = sand.u32 %s91, 1
        %s196 = smul.addr %s195, 128
        %s197 = scalar_lea.vmem [#allocation7], %s196
        %s198 = smul.u32 8, %s24
        %s199 = smul.u32 64, %s24
        %v200 = vld [vmem:[%s171] sm:$0xff]
        %v201 = vld [vmem:[%s171 + $0x8] sm:$0xff]
        %v202 = vld [vmem:[%s171 + $0x10] sm:$0xff]
        %v203 = vld [vmem:[%s171 + $0x18] sm:$0xff]
        %v204 = vld [vmem:[%s171 + $0x20] sm:$0xff]
        %v205 = vld [vmem:[%s171 + $0x28] sm:$0xff]
        %v206 = vld [vmem:[%s171 + $0x30] sm:$0xff]
        %v207 = vld [vmem:[%s171 + $0x38] sm:$0xff]
        %v208 = vld [vmem:[#allocation5] sm:$0xff]
        %v209 = vld [vmem:[#allocation5 + $0x8] sm:$0xff]
        %vm210 = vcmask 130048
        %v212 = vsel %vm210, %v200, 0
        %v215 = vsel %vm210, %v201, 0
        %v218 = vsel %vm210, %v202, 0
        %v221 = vsel %vm210, %v203, 0
        %v224 = vsel %vm210, %v204, 0
        %v227 = vsel %vm210, %v205, 0
        %v230 = vsel %vm210, %v206, 0
        %v233 = vsel %vm210, %v207, 0
        %235 = vmatpush.msra.mxu0 0.0
        %236 = vmatpush.msra.mxu0 0.0
        %237 = vmatpush.msra.mxu0 0.0
        %238 = vmatpush.msra.mxu0 0.0
        %239 = vmatpush.msra.mxu0 0.0
        %240 = vmatpush.msra.mxu0 0.0
        %241 = vmatpush.msra.mxu0 0.0
        %242 = vmatpush.msra.mxu0 0.0
        %243 = vmatpush.msra.mxu0 0.0
        %244 = vmatpush.msra.mxu0 0.0
        %245 = vmatpush.msra.mxu0 0.0
        %246 = vmatpush.msra.mxu0 0.0
        %247 = vmatpush.msra.mxu0 0.0
        %248 = vmatpush.msra.mxu0 0.0
        %v249 = vand.u32 %v209, 4294901760
        %250 = vmatpush.msra.mxu0 %v249
        %v251 = vand.u32 %v208, 4294901760
        %252 = vmatpush.msra.mxu0 %v251
        %v253 = vand.u32 %v212, 4294901760
        %v254 = vsub.f32 %v212, %v253
        %v255 = vand.u32 %v254, 4294901760
        %v256 = vsub.f32 %v254, %v255
        %v257 = vand.u32 %v256, 4294901760
        %258 = vmatmul.f32.gmra.mxu0 %v257
        %v259 = vpop.f32.mrf.mxu0
        %v260 = vadd.f32 0.0, %v259
        %v261 = vand.u32 %v215, 4294901760
        %v262 = vsub.f32 %v215, %v261
        %v263 = vand.u32 %v262, 4294901760
        %v264 = vsub.f32 %v262, %v263
        %v265 = vand.u32 %v264, 4294901760
        %266 = vmatmul.f32.gmra.mxu0 %v265
        %v267 = vpop.f32.mrf.mxu0
        %v268 = vadd.f32 0.0, %v267
        %v269 = vand.u32 %v218, 4294901760
        %v270 = vsub.f32 %v218, %v269
        %v271 = vand.u32 %v270, 4294901760
        %v272 = vsub.f32 %v270, %v271
        %v273 = vand.u32 %v272, 4294901760
        %274 = vmatmul.f32.gmra.mxu0 %v273
        %v275 = vpop.f32.mrf.mxu0
        %v276 = vadd.f32 0.0, %v275
        %v277 = vand.u32 %v221, 4294901760
        %v278 = vsub.f32 %v221, %v277
        %v279 = vand.u32 %v278, 4294901760
        %v280 = vsub.f32 %v278, %v279
        %v281 = vand.u32 %v280, 4294901760
        %282 = vmatmul.f32.gmra.mxu0 %v281
        %v283 = vpop.f32.mrf.mxu0
        %v284 = vadd.f32 0.0, %v283
        %v285 = vand.u32 %v224, 4294901760
        %v286 = vsub.f32 %v224, %v285
        %v287 = vand.u32 %v286, 4294901760
        %v288 = vsub.f32 %v286, %v287
        %v289 = vand.u32 %v288, 4294901760
        %290 = vmatmul.f32.gmra.mxu0 %v289
        %v291 = vpop.f32.mrf.mxu0
        %v292 = vadd.f32 0.0, %v291
        %v293 = vand.u32 %v227, 4294901760
        %v294 = vsub.f32 %v227, %v293
        %v295 = vand.u32 %v294, 4294901760
        %v296 = vsub.f32 %v294, %v295
        %v297 = vand.u32 %v296, 4294901760
        %298 = vmatmul.f32.gmra.mxu0 %v297
        %v299 = vpop.f32.mrf.mxu0
        %v300 = vadd.f32 0.0, %v299
        %v301 = vand.u32 %v230, 4294901760
        %v302 = vsub.f32 %v230, %v301
        %v303 = vand.u32 %v302, 4294901760
        %v304 = vsub.f32 %v302, %v303
        %v305 = vand.u32 %v304, 4294901760
        %306 = vmatmul.f32.gmra.mxu0 %v305
        %v307 = vpop.f32.mrf.mxu0
        %v308 = vadd.f32 0.0, %v307
        %v309 = vand.u32 %v233, 4294901760
        %v310 = vsub.f32 %v233, %v309
        %v311 = vand.u32 %v310, 4294901760
        %v312 = vsub.f32 %v310, %v311
        %v313 = vand.u32 %v312, 4294901760
        %314 = vmatmul.f32.gmra.mxu0 %v313
        %v315 = vpop.f32.mrf.mxu0
        %v316 = vadd.f32 0.0, %v315
        %317 = vdwg.mxu0
        %318 = vmatpush.msra.mxu0 0.0
        %319 = vmatpush.msra.mxu0 0.0
        %320 = vmatpush.msra.mxu0 0.0
        %321 = vmatpush.msra.mxu0 0.0
        %322 = vmatpush.msra.mxu0 0.0
        %323 = vmatpush.msra.mxu0 0.0
        %324 = vmatpush.msra.mxu0 0.0
        %325 = vmatpush.msra.mxu0 0.0
        %326 = vmatpush.msra.mxu0 0.0
        %327 = vmatpush.msra.mxu0 0.0
        %328 = vmatpush.msra.mxu0 0.0
        %329 = vmatpush.msra.mxu0 0.0
        %330 = vmatpush.msra.mxu0 0.0
        %331 = vmatpush.msra.mxu0 0.0
        %v332 = vand.u32 %v209, 4294901760
        %v333 = vsub.f32 %v209, %v332
        %v334 = vand.u32 %v333, 4294901760
        %v335 = vsub.f32 %v333, %v334
        %v336 = vand.u32 %v335, 4294901760
        %337 = vmatpush.msra.mxu0 %v336
        %v338 = vand.u32 %v208, 4294901760
        %v339 = vsub.f32 %v208, %v338
        %v340 = vand.u32 %v339, 4294901760
        %v341 = vsub.f32 %v339, %v340
        %v342 = vand.u32 %v341, 4294901760
        %343 = vmatpush.msra.mxu0 %v342
        %v344 = vand.u32 %v212, 4294901760
        %345 = vmatmul.f32.gmra.mxu0 %v344
        %v346 = vpop.f32.mrf.mxu0
        %v347 = vadd.f32 %v260, %v346
        %v348 = vand.u32 %v215, 4294901760
        %349 = vmatmul.f32.gmra.mxu0 %v348
        %v350 = vpop.f32.mrf.mxu0
        %v351 = vadd.f32 %v268, %v350
        %v352 = vand.u32 %v218, 4294901760
        %353 = vmatmul.f32.gmra.mxu0 %v352
        %v354 = vpop.f32.mrf.mxu0
        %v355 = vadd.f32 %v276, %v354
        %v356 = vand.u32 %v221, 4294901760
        %357 = vmatmul.f32.gmra.mxu0 %v356
        %v358 = vpop.f32.mrf.mxu0
        %v359 = vadd.f32 %v284, %v358
        %v360 = vand.u32 %v224, 4294901760
        %361 = vmatmul.f32.gmra.mxu0 %v360
        %v362 = vpop.f32.mrf.mxu0
        %v363 = vadd.f32 %v292, %v362
        %v364 = vand.u32 %v227, 4294901760
        %365 = vmatmul.f32.gmra.mxu0 %v364
        %v366 = vpop.f32.mrf.mxu0
        %v367 = vadd.f32 %v300, %v366
        %v368 = vand.u32 %v230, 4294901760
        %369 = vmatmul.f32.gmra.mxu0 %v368
        %v370 = vpop.f32.mrf.mxu0
        %v371 = vadd.f32 %v308, %v370
        %v372 = vand.u32 %v233, 4294901760
        %373 = vmatmul.f32.gmra.mxu0 %v372
        %v374 = vpop.f32.mrf.mxu0
        %v375 = vadd.f32 %v316, %v374
        %376 = vdwg.mxu0
        %377 = vmatpush.msra.mxu0 0.0
        %378 = vmatpush.msra.mxu0 0.0
        %379 = vmatpush.msra.mxu0 0.0
        %380 = vmatpush.msra.mxu0 0.0
        %381 = vmatpush.msra.mxu0 0.0
        %382 = vmatpush.msra.mxu0 0.0
        %383 = vmatpush.msra.mxu0 0.0
        %384 = vmatpush.msra.mxu0 0.0
        %385 = vmatpush.msra.mxu0 0.0
        %386 = vmatpush.msra.mxu0 0.0
        %387 = vmatpush.msra.mxu0 0.0
        %388 = vmatpush.msra.mxu0 0.0
        %389 = vmatpush.msra.mxu0 0.0
        %390 = vmatpush.msra.mxu0 0.0
        %v391 = vand.u32 %v209, 4294901760
        %v392 = vsub.f32 %v209, %v391
        %393 = vmatpush.msra.mxu0 %v392
        %v394 = vand.u32 %v208, 4294901760
        %v395 = vsub.f32 %v208, %v394
        %396 = vmatpush.msra.mxu0 %v395
        %v397 = vand.u32 %v212, 4294901760
        %v398 = vsub.f32 %v212, %v397
        %399 = vmatmul.f32.gmra.mxu0 %v398
        %v400 = vpop.f32.mrf.mxu0
        %v401 = vadd.f32 %v347, %v400
        %v402 = vand.u32 %v215, 4294901760
        %v403 = vsub.f32 %v215, %v402
        %404 = vmatmul.f32.gmra.mxu0 %v403
        %v405 = vpop.f32.mrf.mxu0
        %v406 = vadd.f32 %v351, %v405
        %v407 = vand.u32 %v218, 4294901760
        %v408 = vsub.f32 %v218, %v407
        %409 = vmatmul.f32.gmra.mxu0 %v408
        %v410 = vpop.f32.mrf.mxu0
        %v411 = vadd.f32 %v355, %v410
        %v412 = vand.u32 %v221, 4294901760
        %v413 = vsub.f32 %v221, %v412
        %414 = vmatmul.f32.gmra.mxu0 %v413
        %v415 = vpop.f32.mrf.mxu0
        %v416 = vadd.f32 %v359, %v415
        %v417 = vand.u32 %v224, 4294901760
        %v418 = vsub.f32 %v224, %v417
        %419 = vmatmul.f32.gmra.mxu0 %v418
        %v420 = vpop.f32.mrf.mxu0
        %v421 = vadd.f32 %v363, %v420
        %v422 = vand.u32 %v227, 4294901760
        %v423 = vsub.f32 %v227, %v422
        %424 = vmatmul.f32.gmra.mxu0 %v423
        %v425 = vpop.f32.mrf.mxu0
        %v426 = vadd.f32 %v367, %v425
        %v427 = vand.u32 %v230, 4294901760
        %v428 = vsub.f32 %v230, %v427
        %429 = vmatmul.f32.gmra.mxu0 %v428
        %v430 = vpop.f32.mrf.mxu0
        %v431 = vadd.f32 %v371, %v430
        %v432 = vand.u32 %v233, 4294901760
        %v433 = vsub.f32 %v233, %v432
        %434 = vmatmul.f32.gmra.mxu0 %v433
        %v435 = vpop.f32.mrf.mxu0
        %v436 = vadd.f32 %v375, %v435
        %437 = vdwg.mxu0
        %438 = vmatpush.msra.mxu0 0.0
        %439 = vmatpush.msra.mxu0 0.0
        %440 = vmatpush.msra.mxu0 0.0
        %441 = vmatpush.msra.mxu0 0.0
        %442 = vmatpush.msra.mxu0 0.0
        %443 = vmatpush.msra.mxu0 0.0
        %444 = vmatpush.msra.mxu0 0.0
        %445 = vmatpush.msra.mxu0 0.0
        %446 = vmatpush.msra.mxu0 0.0
        %447 = vmatpush.msra.mxu0 0.0
        %448 = vmatpush.msra.mxu0 0.0
        %449 = vmatpush.msra.mxu0 0.0
        %450 = vmatpush.msra.mxu0 0.0
        %451 = vmatpush.msra.mxu0 0.0
        %v452 = vand.u32 %v209, 4294901760
        %453 = vmatpush.msra.mxu0 %v452
        %v454 = vand.u32 %v208, 4294901760
        %455 = vmatpush.msra.mxu0 %v454
        %v456 = vand.u32 %v212, 4294901760
        %v457 = vsub.f32 %v212, %v456
        %v458 = vand.u32 %v457, 4294901760
        %459 = vmatmul.f32.gmra.mxu0 %v458
        %v460 = vpop.f32.mrf.mxu0
        %v461 = vadd.f32 %v401, %v460
        %v462 = vand.u32 %v215, 4294901760
        %v463 = vsub.f32 %v215, %v462
        %v464 = vand.u32 %v463, 4294901760
        %465 = vmatmul.f32.gmra.mxu0 %v464
        %v466 = vpop.f32.mrf.mxu0
        %v467 = vadd.f32 %v406, %v466
        %v468 = vand.u32 %v218, 4294901760
        %v469 = vsub.f32 %v218, %v468
        %v470 = vand.u32 %v469, 4294901760
        %471 = vmatmul.f32.gmra.mxu0 %v470
        %v472 = vpop.f32.mrf.mxu0
        %v473 = vadd.f32 %v411, %v472
        %v474 = vand.u32 %v221, 4294901760
        %v475 = vsub.f32 %v221, %v474
        %v476 = vand.u32 %v475, 4294901760
        %477 = vmatmul.f32.gmra.mxu0 %v476
        %v478 = vpop.f32.mrf.mxu0
        %v479 = vadd.f32 %v416, %v478
        %v480 = vand.u32 %v224, 4294901760
        %v481 = vsub.f32 %v224, %v480
        %v482 = vand.u32 %v481, 4294901760
        %483 = vmatmul.f32.gmra.mxu0 %v482
        %v484 = vpop.f32.mrf.mxu0
        %v485 = vadd.f32 %v421, %v484
        %v486 = vand.u32 %v227, 4294901760
        %v487 = vsub.f32 %v227, %v486
        %v488 = vand.u32 %v487, 4294901760
        %489 = vmatmul.f32.gmra.mxu0 %v488
        %v490 = vpop.f32.mrf.mxu0
        %v491 = vadd.f32 %v426, %v490
        %v492 = vand.u32 %v230, 4294901760
        %v493 = vsub.f32 %v230, %v492
        %v494 = vand.u32 %v493, 4294901760
        %495 = vmatmul.f32.gmra.mxu0 %v494
        %v496 = vpop.f32.mrf.mxu0
        %v497 = vadd.f32 %v431, %v496
        %v498 = vand.u32 %v233, 4294901760
        %v499 = vsub.f32 %v233, %v498
        %v500 = vand.u32 %v499, 4294901760
        %501 = vmatmul.f32.gmra.mxu0 %v500
        %v502 = vpop.f32.mrf.mxu0
        %v503 = vadd.f32 %v436, %v502
        %504 = vdwg.mxu0
        %505 = vmatpush.msra.mxu0 0.0
        %506 = vmatpush.msra.mxu0 0.0
        %507 = vmatpush.msra.mxu0 0.0
        %508 = vmatpush.msra.mxu0 0.0
        %509 = vmatpush.msra.mxu0 0.0
        %510 = vmatpush.msra.mxu0 0.0
        %511 = vmatpush.msra.mxu0 0.0
        %512 = vmatpush.msra.mxu0 0.0
        %513 = vmatpush.msra.mxu0 0.0
        %514 = vmatpush.msra.mxu0 0.0
        %515 = vmatpush.msra.mxu0 0.0
        %516 = vmatpush.msra.mxu0 0.0
        %517 = vmatpush.msra.mxu0 0.0
        %518 = vmatpush.msra.mxu0 0.0
        %v519 = vand.u32 %v209, 4294901760
        %v520 = vsub.f32 %v209, %v519
        %v521 = vand.u32 %v520, 4294901760
        %522 = vmatpush.msra.mxu0 %v521
        %v523 = vand.u32 %v208, 4294901760
        %v524 = vsub.f32 %v208, %v523
        %v525 = vand.u32 %v524, 4294901760
        %526 = vmatpush.msra.mxu0 %v525
        %v527 = vand.u32 %v212, 4294901760
        %528 = vmatmul.f32.gmra.mxu0 %v527
        %v529 = vpop.f32.mrf.mxu0
        %v530 = vadd.f32 %v461, %v529
        %v531 = vand.u32 %v215, 4294901760
        %532 = vmatmul.f32.gmra.mxu0 %v531
        %v533 = vpop.f32.mrf.mxu0
        %v534 = vadd.f32 %v467, %v533
        %v535 = vand.u32 %v218, 4294901760
        %536 = vmatmul.f32.gmra.mxu0 %v535
        %v537 = vpop.f32.mrf.mxu0
        %v538 = vadd.f32 %v473, %v537
        %v539 = vand.u32 %v221, 4294901760
        %540 = vmatmul.f32.gmra.mxu0 %v539
        %v541 = vpop.f32.mrf.mxu0
        %v542 = vadd.f32 %v479, %v541
        %v543 = vand.u32 %v224, 4294901760
        %544 = vmatmul.f32.gmra.mxu0 %v543
        %v545 = vpop.f32.mrf.mxu0
        %v546 = vadd.f32 %v485, %v545
        %v547 = vand.u32 %v227, 4294901760
        %548 = vmatmul.f32.gmra.mxu0 %v547
        %v549 = vpop.f32.mrf.mxu0
        %v550 = vadd.f32 %v491, %v549
        %v551 = vand.u32 %v230, 4294901760
        %552 = vmatmul.f32.gmra.mxu0 %v551
        %v553 = vpop.f32.mrf.mxu0
        %v554 = vadd.f32 %v497, %v553
        %v555 = vand.u32 %v233, 4294901760
        %556 = vmatmul.f32.gmra.mxu0 %v555
        %v557 = vpop.f32.mrf.mxu0
        %v558 = vadd.f32 %v503, %v557
        %559 = vdwg.mxu0
        %560 = vmatpush.msra.mxu0 0.0
        %561 = vmatpush.msra.mxu0 0.0
        %562 = vmatpush.msra.mxu0 0.0
        %563 = vmatpush.msra.mxu0 0.0
        %564 = vmatpush.msra.mxu0 0.0
        %565 = vmatpush.msra.mxu0 0.0
        %566 = vmatpush.msra.mxu0 0.0
        %567 = vmatpush.msra.mxu0 0.0
        %568 = vmatpush.msra.mxu0 0.0
        %569 = vmatpush.msra.mxu0 0.0
        %570 = vmatpush.msra.mxu0 0.0
        %571 = vmatpush.msra.mxu0 0.0
        %572 = vmatpush.msra.mxu0 0.0
        %573 = vmatpush.msra.mxu0 0.0
        %v574 = vand.u32 %v209, 4294901760
        %575 = vmatpush.msra.mxu0 %v574
        %v576 = vand.u32 %v208, 4294901760
        %577 = vmatpush.msra.mxu0 %v576
        %v578 = vand.u32 %v212, 4294901760
        %579 = vmatmul.f32.gmra.mxu0 %v578
        %v580 = vpop.f32.mrf.mxu0
        %v581 = vadd.f32 %v530, %v580
        %v582 = vand.u32 %v215, 4294901760
        %583 = vmatmul.f32.gmra.mxu0 %v582
        %v584 = vpop.f32.mrf.mxu0
        %v585 = vadd.f32 %v534, %v584
        %v586 = vand.u32 %v218, 4294901760
        %587 = vmatmul.f32.gmra.mxu0 %v586
        %v588 = vpop.f32.mrf.mxu0
        %v589 = vadd.f32 %v538, %v588
        %v590 = vand.u32 %v221, 4294901760
        %591 = vmatmul.f32.gmra.mxu0 %v590
        %v592 = vpop.f32.mrf.mxu0
        %v593 = vadd.f32 %v542, %v592
        %v594 = vand.u32 %v224, 4294901760
        %595 = vmatmul.f32.gmra.mxu0 %v594
        %v596 = vpop.f32.mrf.mxu0
        %v597 = vadd.f32 %v546, %v596
        %v598 = vand.u32 %v227, 4294901760
        %599 = vmatmul.f32.gmra.mxu0 %v598
        %v600 = vpop.f32.mrf.mxu0
        %v601 = vadd.f32 %v550, %v600
        %v602 = vand.u32 %v230, 4294901760
        %603 = vmatmul.f32.gmra.mxu0 %v602
        %v604 = vpop.f32.mrf.mxu0
        %v605 = vadd.f32 %v554, %v604
        %v606 = vand.u32 %v233, 4294901760
        %607 = vmatmul.f32.gmra.mxu0 %v606
        %v608 = vpop.f32.mrf.mxu0
        %v609 = vadd.f32 %v558, %v608
        %610 = vdwg.mxu0
        %v619 = vrot.slane %v581, 1
        %v620 = vrot.slane %v581, 2
        %v621 = vrot.slane %v581, 3
        %v622 = vrot.slane %v581, 4
        %v623 = vrot.slane %v581, 5
        %v624 = vrot.slane %v581, 6
        %v625 = vrot.slane %v581, 7
        %v626 = vrot.slane %v585, 1
        %v627 = vrot.slane %v585, 2
        %v628 = vrot.slane %v585, 3
        %v629 = vrot.slane %v585, 4
        %v630 = vrot.slane %v585, 5
        %v631 = vrot.slane %v585, 6
        %v632 = vrot.slane %v585, 7
        %v633 = vrot.slane %v589, 1
        %v634 = vrot.slane %v589, 2
        %v635 = vrot.slane %v589, 3
        %v636 = vrot.slane %v589, 4
        %v637 = vrot.slane %v589, 5
        %v638 = vrot.slane %v589, 6
        %v639 = vrot.slane %v589, 7
        %v640 = vrot.slane %v593, 1
        %v641 = vrot.slane %v593, 2
        %v642 = vrot.slane %v593, 3
        %v643 = vrot.slane %v593, 4
        %v644 = vrot.slane %v593, 5
        %v645 = vrot.slane %v593, 6
        %v646 = vrot.slane %v593, 7
        %v647 = vrot.slane %v597, 1
        %v648 = vrot.slane %v597, 2
        %v649 = vrot.slane %v597, 3
        %v650 = vrot.slane %v597, 4
        %v651 = vrot.slane %v597, 5
        %v652 = vrot.slane %v597, 6
        %v653 = vrot.slane %v597, 7
        %v654 = vrot.slane %v601, 1
        %v655 = vrot.slane %v601, 2
        %v656 = vrot.slane %v601, 3
        %v657 = vrot.slane %v601, 4
        %v658 = vrot.slane %v601, 5
        %v659 = vrot.slane %v601, 6
        %v660 = vrot.slane %v601, 7
        %v661 = vrot.slane %v605, 1
        %v662 = vrot.slane %v605, 2
        %v663 = vrot.slane %v605, 3
        %v664 = vrot.slane %v605, 4
        %v665 = vrot.slane %v605, 5
        %v666 = vrot.slane %v605, 6
        %v667 = vrot.slane %v605, 7
        %v668 = vrot.slane %v609, 1
        %v669 = vrot.slane %v609, 2
        %v670 = vrot.slane %v609, 3
        %v671 = vrot.slane %v609, 4
        %v672 = vrot.slane %v609, 5
        %v673 = vrot.slane %v609, 6
        %v674 = vrot.slane %v609, 7
        %v675 = vperm.slane %v581, 0
        %v676 = vperm.slane %v619, 0
        %v677 = vperm.slane %v620, 0
        %v678 = vperm.slane %v621, 0
        %v679 = vperm.slane %v622, 0
        %v680 = vperm.slane %v623, 0
        %v681 = vperm.slane %v624, 0
        %v682 = vperm.slane %v625, 0
        %v683 = vperm.slane %v585, 0
        %v684 = vperm.slane %v626, 0
        %v685 = vperm.slane %v627, 0
        %v686 = vperm.slane %v628, 0
        %v687 = vperm.slane %v629, 0
        %v688 = vperm.slane %v630, 0
        %v689 = vperm.slane %v631, 0
        %v690 = vperm.slane %v632, 0
        %v691 = vperm.slane %v589, 0
        %v692 = vperm.slane %v633, 0
        %v693 = vperm.slane %v634, 0
        %v694 = vperm.slane %v635, 0
        %v695 = vperm.slane %v636, 0
        %v696 = vperm.slane %v637, 0
        %v697 = vperm.slane %v638, 0
        %v698 = vperm.slane %v639, 0
        %v699 = vperm.slane %v593, 0
        %v700 = vperm.slane %v640, 0
        %v701 = vperm.slane %v641, 0
        %v702 = vperm.slane %v642, 0
        %v703 = vperm.slane %v643, 0
        %v704 = vperm.slane %v644, 0
        %v705 = vperm.slane %v645, 0
        %v706 = vperm.slane %v646, 0
        %v707 = vperm.slane %v597, 0
        %v708 = vperm.slane %v647, 0
        %v709 = vperm.slane %v648, 0
        %v710 = vperm.slane %v649, 0
        %v711 = vperm.slane %v650, 0
        %v712 = vperm.slane %v651, 0
        %v713 = vperm.slane %v652, 0
        %v714 = vperm.slane %v653, 0
        %v715 = vperm.slane %v601, 0
        %v716 = vperm.slane %v654, 0
        %v717 = vperm.slane %v655, 0
        %v718 = vperm.slane %v656, 0
        %v719 = vperm.slane %v657, 0
        %v720 = vperm.slane %v658, 0
        %v721 = vperm.slane %v659, 0
        %v722 = vperm.slane %v660, 0
        %v723 = vperm.slane %v605, 0
        %v724 = vperm.slane %v661, 0
        %v725 = vperm.slane %v662, 0
        %v726 = vperm.slane %v663, 0
        %v727 = vperm.slane %v664, 0
        %v728 = vperm.slane %v665, 0
        %v729 = vperm.slane %v666, 0
        %v730 = vperm.slane %v667, 0
        %v731 = vperm.slane %v609, 0
        %v732 = vperm.slane %v668, 0
        %v733 = vperm.slane %v669, 0
        %v734 = vperm.slane %v670, 0
        %v735 = vperm.slane %v671, 0
        %v736 = vperm.slane %v672, 0
        %v737 = vperm.slane %v673, 0
        %v738 = vperm.slane %v674, 0
        %vm803 = vcmask 254976
        %804 = vst.msk [vmem:[%s197] sm:$0x3] %vm803, %v675
        %805 = vst.msk [vmem:[%s197 + $0x2] sm:$0x3] %vm803, %v676
        %806 = vst.msk [vmem:[%s197 + $0x4] sm:$0x3] %vm803, %v677
        %807 = vst.msk [vmem:[%s197 + $0x6] sm:$0x3] %vm803, %v678
        %808 = vst.msk [vmem:[%s197 + $0x8] sm:$0x3] %vm803, %v679
        %809 = vst.msk [vmem:[%s197 + $0xa] sm:$0x3] %vm803, %v680
        %810 = vst.msk [vmem:[%s197 + $0xc] sm:$0x3] %vm803, %v681
        %811 = vst.msk [vmem:[%s197 + $0xe] sm:$0x3] %vm803, %v682
        %812 = vst.msk [vmem:[%s197 + $0x10] sm:$0x3] %vm803, %v683
        %813 = vst.msk [vmem:[%s197 + $0x12] sm:$0x3] %vm803, %v684
        %814 = vst.msk [vmem:[%s197 + $0x14] sm:$0x3] %vm803, %v685
        %815 = vst.msk [vmem:[%s197 + $0x16] sm:$0x3] %vm803, %v686
        %816 = vst.msk [vmem:[%s197 + $0x18] sm:$0x3] %vm803, %v687
        %817 = vst.msk [vmem:[%s197 + $0x1a] sm:$0x3] %vm803, %v688
        %818 = vst.msk [vmem:[%s197 + $0x1c] sm:$0x3] %vm803, %v689
        %819 = vst.msk [vmem:[%s197 + $0x1e] sm:$0x3] %vm803, %v690
        %820 = vst.msk [vmem:[%s197 + $0x20] sm:$0x3] %vm803, %v691
        %821 = vst.msk [vmem:[%s197 + $0x22] sm:$0x3] %vm803, %v692
        %822 = vst.msk [vmem:[%s197 + $0x24] sm:$0x3] %vm803, %v693
        %823 = vst.msk [vmem:[%s197 + $0x26] sm:$0x3] %vm803, %v694
        %824 = vst.msk [vmem:[%s197 + $0x28] sm:$0x3] %vm803, %v695
        %825 = vst.msk [vmem:[%s197 + $0x2a] sm:$0x3] %vm803, %v696
        %826 = vst.msk [vmem:[%s197 + $0x2c] sm:$0x3] %vm803, %v697
        %827 = vst.msk [vmem:[%s197 + $0x2e] sm:$0x3] %vm803, %v698
        %828 = vst.msk [vmem:[%s197 + $0x30] sm:$0x3] %vm803, %v699
        %829 = vst.msk [vmem:[%s197 + $0x32] sm:$0x3] %vm803, %v700
        %830 = vst.msk [vmem:[%s197 + $0x34] sm:$0x3] %vm803, %v701
        %831 = vst.msk [vmem:[%s197 + $0x36] sm:$0x3] %vm803, %v702
        %832 = vst.msk [vmem:[%s197 + $0x38] sm:$0x3] %vm803, %v703
        %833 = vst.msk [vmem:[%s197 + $0x3a] sm:$0x3] %vm803, %v704
        %834 = vst.msk [vmem:[%s197 + $0x3c] sm:$0x3] %vm803, %v705
        %835 = vst.msk [vmem:[%s197 + $0x3e] sm:$0x3] %vm803, %v706
        %836 = vst.msk [vmem:[%s197 + $0x40] sm:$0x3] %vm803, %v707
        %837 = vst.msk [vmem:[%s197 + $0x42] sm:$0x3] %vm803, %v708
        %838 = vst.msk [vmem:[%s197 + $0x44] sm:$0x3] %vm803, %v709
        %839 = vst.msk [vmem:[%s197 + $0x46] sm:$0x3] %vm803, %v710
        %840 = vst.msk [vmem:[%s197 + $0x48] sm:$0x3] %vm803, %v711
        %841 = vst.msk [vmem:[%s197 + $0x4a] sm:$0x3] %vm803, %v712
        %842 = vst.msk [vmem:[%s197 + $0x4c] sm:$0x3] %vm803, %v713
        %843 = vst.msk [vmem:[%s197 + $0x4e] sm:$0x3] %vm803, %v714
        %844 = vst.msk [vmem:[%s197 + $0x50] sm:$0x3] %vm803, %v715
        %845 = vst.msk [vmem:[%s197 + $0x52] sm:$0x3] %vm803, %v716
        %846 = vst.msk [vmem:[%s197 + $0x54] sm:$0x3] %vm803, %v717
        %847 = vst.msk [vmem:[%s197 + $0x56] sm:$0x3] %vm803, %v718
        %848 = vst.msk [vmem:[%s197 + $0x58] sm:$0x3] %vm803, %v719
        %849 = vst.msk [vmem:[%s197 + $0x5a] sm:$0x3] %vm803, %v720
        %850 = vst.msk [vmem:[%s197 + $0x5c] sm:$0x3] %vm803, %v721
        %851 = vst.msk [vmem:[%s197 + $0x5e] sm:$0x3] %vm803, %v722
        %852 = vst.msk [vmem:[%s197 + $0x60] sm:$0x3] %vm803, %v723
        %853 = vst.msk [vmem:[%s197 + $0x62] sm:$0x3] %vm803, %v724
        %854 = vst.msk [vmem:[%s197 + $0x64] sm:$0x3] %vm803, %v725
        %855 = vst.msk [vmem:[%s197 + $0x66] sm:$0x3] %vm803, %v726
        %856 = vst.msk [vmem:[%s197 + $0x68] sm:$0x3] %vm803, %v727
        %857 = vst.msk [vmem:[%s197 + $0x6a] sm:$0x3] %vm803, %v728
        %858 = vst.msk [vmem:[%s197 + $0x6c] sm:$0x3] %vm803, %v729
        %859 = vst.msk [vmem:[%s197 + $0x6e] sm:$0x3] %vm803, %v730
        %860 = vst.msk [vmem:[%s197 + $0x70] sm:$0x3] %vm803, %v731
        %861 = vst.msk [vmem:[%s197 + $0x72] sm:$0x3] %vm803, %v732
        %862 = vst.msk [vmem:[%s197 + $0x74] sm:$0x3] %vm803, %v733
        %863 = vst.msk [vmem:[%s197 + $0x76] sm:$0x3] %vm803, %v734
        %864 = vst.msk [vmem:[%s197 + $0x78] sm:$0x3] %vm803, %v735
        %865 = vst.msk [vmem:[%s197 + $0x7a] sm:$0x3] %vm803, %v736
        %866 = vst.msk [vmem:[%s197 + $0x7c] sm:$0x3] %vm803, %v737
        %867 = vst.msk [vmem:[%s197 + $0x7e] sm:$0x3] %vm803, %v738
        %s868 = sand.u32 %s91, 1
        %s869 = scalar_lea.sflag [#allocation4], %s868
        %s870 = sand.u32 %s91, 1
        %s871 = smul.addr %s870, 128
        %s872 = scalar_lea.vmem [#allocation7], %s871
        // Predicated region
        $region37: #{upsample_block.1} parent=27 // pred_check
          %p873 = pneg %p101
        $region38: #{upsample_block.1} parent=27 // pred_check_branch
          %875 = sbr.rel (%p873) target = $region40
        $region39: #{upsample_block.1} parent=27 // pred_region
          %s876 = smul.u32 64, %s24
          %878 = vsyncadd %s869, 0
          %s879 = sadd.s32 %s25, %s876
          %s880 = smul.addr %s879, 2
          %s881 = scalar_lea.hbm %s2, %s880
          %s882 = sshll.u32 %s872, 4
          %s883 = int_to_ptr.vmem [resolvable:$true] %s882
          %s884 = sshll.u32 %s881, 4
          %s885 = int_to_ptr.hbm [resolvable:$true] %s884
          %890 = dma.vmem_to_hbm [thread:$0]  %s883, 2048, %s885, %s869, 32, 32, 2
        $region40: #{upsample_block.1} parent=27 // pred_fallthru
          _
      $region28: #{upsample_block.1} parent=5 // pred_fallthru
        _
      %p891 = scmp.le.s32.totalorder 2, %s15
      // Predicated region
      $region41: #{upsample_block.1} parent=5 // pred_check
        %p892 = pneg %p891
      $region42: #{upsample_block.1} parent=5 // pred_check_branch
        %894 = sbr.rel (%p892) target = $region44
      $region43: #{upsample_block.1} parent=5 // pred_region
        %s895 = ssub.s32 %s15, 2
        // Predicated region
        $region45: #{upsample_block.1} parent=43 // pred_check
          %p896 = pneg %p107
        $region46: #{upsample_block.1} parent=43 // pred_check_branch
          %898 = sbr.rel (%p896) target = $region48
        $region47: #{upsample_block.1} parent=43 // pred_region
          %s899 = sand.u32 %s92, 1
          %s900 = scalar_lea.sflag [#allocation4], %s899
          %s901 = sand.u32 %s92, 1
          %s902 = smul.addr %s901, 128
          %s903 = scalar_lea.vmem [#allocation7], %s902
          %905 = dma.done %s900, 2048
        $region48: #{upsample_block.1} parent=43 // pred_fallthru
          _
      $region44: #{upsample_block.1} parent=5 // pred_fallthru
        _
    $region6: #{upsample_block.1} parent=1 // loop_footer
      %s19 = sadd.s32 1, %s15
    $region7: #{upsample_block.1} parent=1 // loop_footer_branch
      %14 = sbr.rel target = $region3
    $region8: #{upsample_block.1} parent=1 // loop_exit
      _
    %906 = vsyncpa [#allocation3], 1
    %s907 = scalar_lea.sflag [#allocation3], 1
    %908 = vsyncpa %s907, 1
    %909 = vsyncpa [#allocation6], 1
    %910 = vsyncpa [#allocation4], 1
    %s911 = scalar_lea.sflag [#allocation4], 1
    %912 = vsyncpa %s911, 1

</llo_original>
